<compile_context>
chip_gen: v5e
topology: v5e:2x2
jax: 0.10.0
libtpu: 0.0.40
codegen_flags: <defaults>
</compile_context>

<pallas_src>
import jax
import jax.numpy as jnp
from jax.experimental import pallas as pl
from jax.experimental.pallas import tpu as pltpu


def _round_up(v, m):
    return ((v + m - 1) // m) * m


def _make_dense_kernel(F, G):
    """Build the per-tile kernel with a statically chosen output-store strategy."""
    aligned = (F % 128 == 0) and (G % 128 == 0)
    small = (F + G) <= 128
    use_slice_stores = aligned or not small  # concat only when F+G fits one vreg width

    def kernel(x_ref, w1_ref, b1_ref, w2_ref, b2_ref, out_ref):
        x = x_ref[...]                                                    # (Bt, F)
        h1 = jnp.dot(x, w1_ref[...], preferred_element_type=jnp.float32) + b1_ref[...]
        h1 = jnp.maximum(h1, 0.0)                                         # (Bt, G)
        h2 = jnp.dot(h1, w2_ref[...], preferred_element_type=jnp.float32) + b2_ref[...]
        h2 = jnp.maximum(h2, 0.0)                                         # (Bt, G)

        if use_slice_stores:
            # Two direct slice stores; unmasked when F, G are 128-aligned, and even
            # when not, this avoids the XLU lane-shuffle + VMEM temp of a wide concat.
            out_ref[:, :F] = x.astype(out_ref.dtype)
            out_ref[:, F:] = h2.astype(out_ref.dtype)
        else:
            # F+G <= 128: one fused store of the whole (narrow) output row block.
            out_ref[...] = jnp.concatenate(
                [x.astype(out_ref.dtype), h2.astype(out_ref.dtype)], axis=1
            )

    return kernel


def _pick_batch_tile(B, F, G, itemsize,
                     target_bytes=4 << 20,       # ~4 MiB of x+out per grid step
                     vmem_tile_budget=36 << 20): # double-buffered x+out tiles budget
    """Sublane-aligned batch tile sized by bytes, VMEM budget, and core count."""
    sublane = {4: 8, 2: 16, 1: 32}.get(itemsize, 8)
    if B <= sublane:
        return B  # block equal to the full array dim is always legal

    row_bytes = (2 * F + G) * itemsize           # one row of x tile + out tile
    bb = target_bytes // row_bytes               # byte-targeted tile
    bb = min(bb, vmem_tile_budget // (2 * row_bytes))  # double-buffer fits budget
    bb = min(bb, 4096)
    bb = min(bb, _round_up(B, sublane))          # never bigger than the padded batch
    if B >= 2 * sublane:
        # Keep at least two grid steps so both v7x TensorCores get work.
        bb = min(bb, _round_up((B + 1) // 2, sublane))
    bb = max(bb, sublane)
    bb = (bb // sublane) * sublane
    return int(bb)


def _const_spec(shape, single_buffer):
    """BlockSpec for a parameter that stays resident in VMEM across grid steps."""
    index_map = lambda i: (0, 0)
    if single_buffer:
        # Block index never changes -> second pipeline buffer is dead VMEM.
        return pl.BlockSpec(shape, index_map, pipeline_mode=pl.Buffered(buffer_count=1))
    return pl.BlockSpec(shape, index_map)


def dense_layer(x, w1, b1, w2, b2):
    B, F = x.shape
    G = w1.shape[1]
    x_item = x.dtype.itemsize
    p_item = w1.dtype.itemsize

    block_b = _pick_batch_tile(B, F, G, x_item)
    grid = (pl.cdiv(B, block_b),)

    out_shape = jax.ShapeDtypeStruct((B, F + G), x.dtype)
    kernel = _make_dense_kernel(F, G)

    # Explicit VMEM budget: double-buffered x+out tiles + (double-buffered) params.
    param_bytes = (F * G + G + G * G + G) * p_item
    tile_bytes = block_b * (2 * F + G) * x_item
    needed = 2 * tile_bytes + 2 * param_bytes + (2 << 20)   # + compiler slack
    vmem_limit = int(min(48 << 20, max(32 << 20, needed)))  # <=48MiB: safe on v7x 64MiB

    cost = pl.CostEstimate(
        flops=2 * B * F * G + 2 * B * G * G + 4 * B * G,
        transcendentals=0,
        bytes_accessed=(B * F * x_item              # x in
                        + param_bytes               # weights / biases
                        + B * (F + G) * x_item),    # out
    )

    x_spec = pl.BlockSpec((block_b, F), lambda i: (i, 0))
    out_spec = pl.BlockSpec((block_b, F + G), lambda i: (i, 0))
    param_shapes = [(F, G), (1, G), (G, G), (1, G)]

    def _call(single_buffer_params):
        return pl.pallas_call(
            kernel,
            out_shape=out_shape,
            grid=grid,
            in_specs=[x_spec] + [_const_spec(s, single_buffer_params)
                                 for s in param_shapes],
            out_specs=out_spec,
            compiler_params=pltpu.CompilerParams(
                dimension_semantics=("parallel",),   # shard batch tiles across TCs
                vmem_limit_bytes=vmem_limit,
            ),
            cost_estimate=cost,
        )(x, w1, b1, w2, b2)

    try:
        return _call(True)
    except Exception:
        # Build without single-buffered params if this JAX/Mosaic build rejects
        # pipeline_mode=Buffered(1); costs only a few KiB of extra VMEM.
        return _call(False)


if __name__ == "__main__":
    # Small shapes consistent with the module's 2D nn.Linear input.
    # B=16 so the batch grid has 2 steps (exercises the v7x two-core path).
    B, in_features, growth_rate = 16, 32, 16

    key = jax.random.PRNGKey(0)
    kx, k1, k2, k3, k4 = jax.random.split(key, 5)

    x = jax.random.normal(kx, (B, in_features), dtype=jnp.float32)
    # torch Linear weight is (out, in); we store the transpose (in, out).
    w1 = jax.random.normal(k1, (in_features, growth_rate), dtype=jnp.float32) * 0.1
    b1 = jax.random.normal(k2, (1, growth_rate), dtype=jnp.float32) * 0.1
    w2 = jax.random.normal(k3, (growth_rate, growth_rate), dtype=jnp.float32) * 0.1
    b2 = jax.random.normal(k4, (1, growth_rate), dtype=jnp.float32) * 0.1

    out = dense_layer(x, w1, b1, w2, b2)
    out = jax.block_until_ready(out)

    # Reference check in plain JAX (same semantics as the PyTorch module).
    h1 = jnp.maximum(x @ w1 + b1, 0.0)
    h2 = jnp.maximum(h1 @ w2 + b2, 0.0)
    ref = jnp.concatenate([x, h2], axis=1)
    assert out.shape == (B, in_features + growth_rate)
    assert jnp.allclose(out, ref, atol=1e-5, rtol=1e-5)

    print("KERNEL_OK")
</pallas_src>

<mosaic_0001>
module attributes {stable_mosaic.version = 11 : i64} {
  func.func @kernel(%arg0: i32, %arg1: memref<8x32xf32, #tpu.memory_space<vmem>>, %arg2: memref<32x16xf32, #tpu.memory_space<vmem>>, %arg3: memref<1x16xf32, #tpu.memory_space<vmem>>, %arg4: memref<16x16xf32, #tpu.memory_space<vmem>>, %arg5: memref<1x16xf32, #tpu.memory_space<vmem>>, %arg6: memref<8x48xf32, #tpu.memory_space<vmem>>) attributes {dimension_semantics = [#tpu.dimension_semantics<parallel>], iteration_bounds = array<i64: 2>, scalar_prefetch = 0 : i64, scratch_operands = 0 : i64, tpu.core_type = #tpu.core_type<tc>, window_params = [{transform_indices = @transform_0, window_bounds = array<i64: 8, 32>}, {pipeline_mode = #tpu.pipeline_mode<synchronous>, transform_indices = @transform_1, window_bounds = array<i64: 32, 16>}, {pipeline_mode = #tpu.pipeline_mode<synchronous>, transform_indices = @transform_2, window_bounds = array<i64: 1, 16>}, {pipeline_mode = #tpu.pipeline_mode<synchronous>, transform_indices = @transform_3, window_bounds = array<i64: 16, 16>}, {pipeline_mode = #tpu.pipeline_mode<synchronous>, transform_indices = @transform_4, window_bounds = array<i64: 1, 16>}, {transform_indices = @transform_5, window_bounds = array<i64: 8, 48>}]} {
    %c0 = arith.constant 0 : index
    %c0_0 = arith.constant 0 : index
    %0 = vector.load %arg1[%c0, %c0_0] : memref<8x32xf32, #tpu.memory_space<vmem>>, vector<8x32xf32>
    %c0_1 = arith.constant 0 : index
    %c0_2 = arith.constant 0 : index
    %1 = vector.load %arg2[%c0_1, %c0_2] : memref<32x16xf32, #tpu.memory_space<vmem>>, vector<32x16xf32>
    %cst = arith.constant dense<0.000000e+00> : vector<8x16xf32>
    %2 = tpu.matmul %0, %1, %cst {dimension_numbers = #tpu.dot_dimension_numbers<[1], [0], [0], [1], [0, 0, 1, 1], [], []>} : vector<8x32xf32>, vector<32x16xf32>, vector<8x16xf32> -> vector<8x16xf32>
    %c0_3 = arith.constant 0 : index
    %c0_4 = arith.constant 0 : index
    %3 = vector.load %arg3[%c0_3, %c0_4] : memref<1x16xf32, #tpu.memory_space<vmem>>, vector<1x16xf32>
    %4 = vector.broadcast %3 : vector<1x16xf32> to vector<8x16xf32>
    %5 = arith.addf %2, %4 : vector<8x16xf32>
    %cst_5 = arith.constant 0.000000e+00 : f32
    %6 = vector.broadcast %cst_5 : f32 to vector<8x16xf32>
    %7 = arith.maximumf %5, %6 : vector<8x16xf32>
    %c0_6 = arith.constant 0 : index
    %c0_7 = arith.constant 0 : index
    %8 = vector.load %arg4[%c0_6, %c0_7] : memref<16x16xf32, #tpu.memory_space<vmem>>, vector<16x16xf32>
    %cst_8 = arith.constant dense<0.000000e+00> : vector<8x16xf32>
    %9 = tpu.matmul %7, %8, %cst_8 {dimension_numbers = #tpu.dot_dimension_numbers<[1], [0], [0], [1], [0, 0, 1, 1], [], []>} : vector<8x16xf32>, vector<16x16xf32>, vector<8x16xf32> -> vector<8x16xf32>
    %c0_9 = arith.constant 0 : index
    %c0_10 = arith.constant 0 : index
    %10 = vector.load %arg5[%c0_9, %c0_10] : memref<1x16xf32, #tpu.memory_space<vmem>>, vector<1x16xf32>
    %11 = vector.broadcast %10 : vector<1x16xf32> to vector<8x16xf32>
    %12 = arith.addf %9, %11 : vector<8x16xf32>
    %cst_11 = arith.constant 0.000000e+00 : f32
    %13 = vector.broadcast %cst_11 : f32 to vector<8x16xf32>
    %14 = arith.maximumf %12, %13 : vector<8x16xf32>
    %15 = tpu.concatenate %0, %14 in 1 : vector<8x32xf32>, vector<8x16xf32> -> vector<8x48xf32>
    %c0_12 = arith.constant 0 : index
    %c0_13 = arith.constant 0 : index
    %16 = vector.load %arg6[%c0_12, %c0_13] : memref<8x48xf32, #tpu.memory_space<vmem>>, vector<8x48xf32>
    tpu.vector_store %arg6[%c0_12, %c0_13], %15 {strides = array<i32>} : memref<8x48xf32, #tpu.memory_space<vmem>>, vector<8x48xf32>,
    return
  }
  func.func @transform_0(%arg0: i32) -> (i32, i32) {
    %c0_i32 = arith.constant 0 : i32
    %c0_i32_0 = arith.constant 0 : i32
    return %arg0, %c0_i32 : i32, i32
  }
  func.func @transform_1(%arg0: i32) -> (i32, i32) {
    %c0_i32 = arith.constant 0 : i32
    %c0_i32_0 = arith.constant 0 : i32
    %c0_i32_1 = arith.constant 0 : i32
    return %c0_i32, %c0_i32_0 : i32, i32
  }
  func.func @transform_2(%arg0: i32) -> (i32, i32) {
    %c0_i32 = arith.constant 0 : i32
    %c0_i32_0 = arith.constant 0 : i32
    %c0_i32_1 = arith.constant 0 : i32
    return %c0_i32, %c0_i32_0 : i32, i32
  }
  func.func @transform_3(%arg0: i32) -> (i32, i32) {
    %c0_i32 = arith.constant 0 : i32
    %c0_i32_0 = arith.constant 0 : i32
    %c0_i32_1 = arith.constant 0 : i32
    return %c0_i32, %c0_i32_0 : i32, i32
  }
  func.func @transform_4(%arg0: i32) -> (i32, i32) {
    %c0_i32 = arith.constant 0 : i32
    %c0_i32_0 = arith.constant 0 : i32
    %c0_i32_1 = arith.constant 0 : i32
    return %c0_i32, %c0_i32_0 : i32, i32
  }
  func.func @transform_5(%arg0: i32) -> (i32, i32) {
    %c0_i32 = arith.constant 0 : i32
    %c0_i32_0 = arith.constant 0 : i32
    return %arg0, %c0_i32 : i32, i32
  }
}

module attributes {stable_mosaic.version = 11 : i64} {
  func.func @kernel(%arg0: i32, %arg1: memref<8x32xf32, #tpu.memory_space<vmem>>, %arg2: memref<32x16xf32, #tpu.memory_space<vmem>>, %arg3: memref<1x16xf32, #tpu.memory_space<vmem>>, %arg4: memref<16x16xf32, #tpu.memory_space<vmem>>, %arg5: memref<1x16xf32, #tpu.memory_space<vmem>>, %arg6: memref<8x48xf32, #tpu.memory_space<vmem>>) attributes {dimension_semantics = [#tpu.dimension_semantics<parallel>], iteration_bounds = array<i64: 2>, scalar_prefetch = 0 : i64, scratch_operands = 0 : i64, tpu.core_type = #tpu.core_type<tc>, window_params = [{transform_indices = @transform_0, window_bounds = array<i64: 8, 32>}, {pipeline_mode = #tpu.pipeline_mode<synchronous>, transform_indices = @transform_1, window_bounds = array<i64: 32, 16>}, {pipeline_mode = #tpu.pipeline_mode<synchronous>, transform_indices = @transform_2, window_bounds = array<i64: 1, 16>}, {pipeline_mode = #tpu.pipeline_mode<synchronous>, transform_indices = @transform_3, window_bounds = array<i64: 16, 16>}, {pipeline_mode = #tpu.pipeline_mode<synchronous>, transform_indices = @transform_4, window_bounds = array<i64: 1, 16>}, {transform_indices = @transform_5, window_bounds = array<i64: 8, 48>}]} {
    %c0 = arith.constant 0 : index
    %c0_0 = arith.constant 0 : index
    %0 = vector.load %arg1[%c0, %c0_0] : memref<8x32xf32, #tpu.memory_space<vmem>>, vector<8x32xf32>
    %c0_1 = arith.constant 0 : index
    %c0_2 = arith.constant 0 : index
    %1 = vector.load %arg2[%c0_1, %c0_2] : memref<32x16xf32, #tpu.memory_space<vmem>>, vector<32x16xf32>
    %cst = arith.constant dense<0.000000e+00> : vector<8x16xf32>
    %2 = tpu.matmul %0, %1, %cst {dimension_numbers = #tpu.dot_dimension_numbers<[1], [0], [0], [1], [0, 0, 1, 1], [], []>} : vector<8x32xf32>, vector<32x16xf32>, vector<8x16xf32> -> vector<8x16xf32>
    %c0_3 = arith.constant 0 : index
    %c0_4 = arith.constant 0 : index
    %3 = vector.load %arg3[%c0_3, %c0_4] : memref<1x16xf32, #tpu.memory_space<vmem>>, vector<1x16xf32>
    %4 = vector.broadcast %3 : vector<1x16xf32> to vector<8x16xf32>
    %5 = arith.addf %2, %4 : vector<8x16xf32>
    %cst_5 = arith.constant 0.000000e+00 : f32
    %6 = vector.broadcast %cst_5 : f32 to vector<8x16xf32>
    %7 = arith.maximumf %5, %6 : vector<8x16xf32>
    %c0_6 = arith.constant 0 : index
    %c0_7 = arith.constant 0 : index
    %8 = vector.load %arg4[%c0_6, %c0_7] : memref<16x16xf32, #tpu.memory_space<vmem>>, vector<16x16xf32>
    %cst_8 = arith.constant dense<0.000000e+00> : vector<8x16xf32>
    %9 = tpu.matmul %7, %8, %cst_8 {dimension_numbers = #tpu.dot_dimension_numbers<[1], [0], [0], [1], [0, 0, 1, 1], [], []>} : vector<8x16xf32>, vector<16x16xf32>, vector<8x16xf32> -> vector<8x16xf32>
    %c0_9 = arith.constant 0 : index
    %c0_10 = arith.constant 0 : index
    %10 = vector.load %arg5[%c0_9, %c0_10] : memref<1x16xf32, #tpu.memory_space<vmem>>, vector<1x16xf32>
    %11 = vector.broadcast %10 : vector<1x16xf32> to vector<8x16xf32>
    %12 = arith.addf %9, %11 : vector<8x16xf32>
    %cst_11 = arith.constant 0.000000e+00 : f32
    %13 = vector.broadcast %cst_11 : f32 to vector<8x16xf32>
    %14 = arith.maximumf %12, %13 : vector<8x16xf32>
    %15 = tpu.concatenate %0, %14 in 1 : vector<8x32xf32>, vector<8x16xf32> -> vector<8x48xf32>
    %c0_12 = arith.constant 0 : index
    %c0_13 = arith.constant 0 : index
    %16 = vector.load %arg6[%c0_12, %c0_13] : memref<8x48xf32, #tpu.memory_space<vmem>>, vector<8x48xf32>
    tpu.vector_store %arg6[%c0_12, %c0_13], %15 {strides = array<i32>} : memref<8x48xf32, #tpu.memory_space<vmem>>, vector<8x48xf32>,
    return
  }
  func.func @transform_0(%arg0: i32) -> (i32, i32) {
    %c0_i32 = arith.constant 0 : i32
    %c0_i32_0 = arith.constant 0 : i32
    return %arg0, %c0_i32 : i32, i32
  }
  func.func @transform_1(%arg0: i32) -> (i32, i32) {
    %c0_i32 = arith.constant 0 : i32
    %c0_i32_0 = arith.constant 0 : i32
    %c0_i32_1 = arith.constant 0 : i32
    return %c0_i32, %c0_i32_0 : i32, i32
  }
  func.func @transform_2(%arg0: i32) -> (i32, i32) {
    %c0_i32 = arith.constant 0 : i32
    %c0_i32_0 = arith.constant 0 : i32
    %c0_i32_1 = arith.constant 0 : i32
    return %c0_i32, %c0_i32_0 : i32, i32
  }
  func.func @transform_3(%arg0: i32) -> (i32, i32) {
    %c0_i32 = arith.constant 0 : i32
    %c0_i32_0 = arith.constant 0 : i32
    %c0_i32_1 = arith.constant 0 : i32
    return %c0_i32, %c0_i32_0 : i32, i32
  }
  func.func @transform_4(%arg0: i32) -> (i32, i32) {
    %c0_i32 = arith.constant 0 : i32
    %c0_i32_0 = arith.constant 0 : i32
    %c0_i32_1 = arith.constant 0 : i32
    return %c0_i32, %c0_i32_0 : i32, i32
  }
  func.func @transform_5(%arg0: i32) -> (i32, i32) {
    %c0_i32 = arith.constant 0 : i32
    %c0_i32_0 = arith.constant 0 : i32
    return %arg0, %c0_i32 : i32, i32
  }
}

</mosaic_0001>

<llo_original>
// kernel: tpu_custom_call.1
$region0: #{tpu_custom_call.1}
  #allocation0 [shape = 'u32[]', space=smem, size = 0x4, offset = 0x4, fixed_abs, tag = 'smem constant byte address 0x4 - core index']
  #allocation1 [shape = 'u32[72,128]{1,0:T(1,128)}', space=vmem, size = 0x9000, scoped, tag = 'internal scratch']
  %s0 = inlined_call_operand.vmem [shape: f32[16,32], index: 0, kind: input, shape index: {}]
  %s1 = inlined_call_operand.vmem [shape: f32[32,16], index: 1, kind: input, shape index: {}]
  %s2 = inlined_call_operand.vmem [shape: f32[1,16], index: 2, kind: input, shape index: {}]
  %s3 = inlined_call_operand.vmem [shape: f32[16,16], index: 3, kind: input, shape index: {}]
  %s4 = inlined_call_operand.vmem [shape: f32[1,16], index: 4, kind: input, shape index: {}]
  %s5 = inlined_call_operand.hbm [shape: f32[16,48], index: 5, kind: output, shape index: {}]
  %s6 = sld [smem:[#allocation0]]
  $region53: #{tpu_custom_call.1} parent=0
    _
  %s8 = ssub.s32 1, %s6
  %s9 = scalar_select 0, %s8, %s6
  $region1: #{tpu_custom_call.1} parent=0
    #allocation2 [shape = 'u8[8192]{0}', space=vmem, size = 0x2000, scoped, tag = 'output window, operand 0']
    #allocation3 [shape = 's32[2]{0}', space=sflag, size = 0x8, scoped, tag = 'scoped memory for tpu_custom_call.1']
    %10 = vsyncpa [#allocation3], 0
    %s11 = scalar_lea.sflag [#allocation3], 1
    %12 = vsyncpa %s11, 0
    loop: start=0, step=1, limit=4
    $region2: #{tpu_custom_call.1} parent=1 // loop_pre_header
      _
    $region3: #{tpu_custom_call.1} parent=1 // loop_header
      %s14 = sphi 0, %s18
      %p15 = scmp.ge.s32.totalorder %s14, 4
      %s24 = sphi 0, %s26
      %s27 = sphi 0, %s24
      %s28 = sphi 0, %s27
      %s44 = sphi 0, %s28
      %s48 = sphi 0, %s48
      %s50 = sphi 0, %s48
      %s51 = sphi 0, %s50
      %s65 = sphi 0, %s51
      %s69 = sphi 0, %s69
      %s71 = sphi 0, %s69
      %s72 = sphi 0, %s71
      %s86 = sphi 0, %s72
      %s90 = sphi 0, %s90
      %s92 = sphi 0, %s90
      %s93 = sphi 0, %s92
      %s107 = sphi 0, %s93
      %s111 = sphi 0, %s111
      %s113 = sphi 0, %s111
      %s114 = sphi 0, %s113
      %s128 = sphi 0, %s114
      %s134 = sphi 0, %s136
      %s137 = sphi 0, %s134
      %s138 = sphi 0, %s137
      %s154 = sphi 0, %s138
    $region4: #{tpu_custom_call.1} parent=1 // loop_header_branch
      %17 = sbr.rel (%p15) target = $region8
    $region5: #{tpu_custom_call.1} parent=1 // loop_body
      %s19 = ssub.s32 %s14, 1
      %s20 = ssub.s32 %s14, 2
      %s21 = sadd.s32 %s14, 1
      %s22 = ssub.s32 %s14, %s21
      %p23 = scmp.eq.s32.totalorder %s22, 0
      %s25 = sadd.s32 %s24, 1
      %s26 = scalar_select %p23, %s24, %s25
      %p29 = pneg %p23
      %p30 = scmp.eq.s32.totalorder %s14, 1
      %p31 = por %p29, %p30
      %p32 = scmp.ne.s32.totalorder %s24, %s27
      %p33 = scmp.eq.s32.totalorder %s14, 0
      %p34 = por %p32, %p33
      %p35 = scmp.ne.s32.totalorder %s24, %s27
      %p36 = scmp.eq.s32.totalorder %s19, 1
      %p37 = por %p35, %p36
      %p38 = scmp.ne.s32.totalorder %s27, %s28
      %p39 = scmp.eq.s32.totalorder %s19, 0
      %p40 = por %p38, %p39
      %p41 = scmp.ne.s32.totalorder %s27, %s28
      %p42 = scmp.eq.s32.totalorder %s20, 1
      %p43 = por %p41, %p42
      %p45 = scmp.ne.s32.totalorder %s28, %s44
      %p46 = scmp.eq.s32.totalorder %s20, 0
      %p47 = por %p45, %p46
      %s49 = sadd.s32 %s48, 1
      %p52 = scmp.eq.s32.totalorder %s14, 1
      %p53 = scmp.ne.s32.totalorder %s48, %s50
      %p54 = scmp.eq.s32.totalorder %s14, 0
      %p55 = por %p53, %p54
      %p56 = scmp.ne.s32.totalorder %s48, %s50
      %p57 = scmp.eq.s32.totalorder %s19, 1
      %p58 = por %p56, %p57
      %p59 = scmp.ne.s32.totalorder %s50, %s51
      %p60 = scmp.eq.s32.totalorder %s19, 0
      %p61 = por %p59, %p60
      %p62 = scmp.ne.s32.totalorder %s50, %s51
      %p63 = scmp.eq.s32.totalorder %s20, 1
      %p64 = por %p62, %p63
      %p66 = scmp.ne.s32.totalorder %s51, %s65
      %p67 = scmp.eq.s32.totalorder %s20, 0
      %p68 = por %p66, %p67
      %s70 = sadd.s32 %s69, 1
      %p73 = scmp.eq.s32.totalorder %s14, 1
      %p74 = scmp.ne.s32.totalorder %s69, %s71
      %p75 = scmp.eq.s32.totalorder %s14, 0
      %p76 = por %p74, %p75
      %p77 = scmp.ne.s32.totalorder %s69, %s71
      %p78 = scmp.eq.s32.totalorder %s19, 1
      %p79 = por %p77, %p78
      %p80 = scmp.ne.s32.totalorder %s71, %s72
      %p81 = scmp.eq.s32.totalorder %s19, 0
      %p82 = por %p80, %p81
      %p83 = scmp.ne.s32.totalorder %s71, %s72
      %p84 = scmp.eq.s32.totalorder %s20, 1
      %p85 = por %p83, %p84
      %p87 = scmp.ne.s32.totalorder %s72, %s86
      %p88 = scmp.eq.s32.totalorder %s20, 0
      %p89 = por %p87, %p88
      %s91 = sadd.s32 %s90, 1
      %p94 = scmp.eq.s32.totalorder %s14, 1
      %p95 = scmp.ne.s32.totalorder %s90, %s92
      %p96 = scmp.eq.s32.totalorder %s14, 0
      %p97 = por %p95, %p96
      %p98 = scmp.ne.s32.totalorder %s90, %s92
      %p99 = scmp.eq.s32.totalorder %s19, 1
      %p100 = por %p98, %p99
      %p101 = scmp.ne.s32.totalorder %s92, %s93
      %p102 = scmp.eq.s32.totalorder %s19, 0
      %p103 = por %p101, %p102
      %p104 = scmp.ne.s32.totalorder %s92, %s93
      %p105 = scmp.eq.s32.totalorder %s20, 1
      %p106 = por %p104, %p105
      %p108 = scmp.ne.s32.totalorder %s93, %s107
      %p109 = scmp.eq.s32.totalorder %s20, 0
      %p110 = por %p108, %p109
      %s112 = sadd.s32 %s111, 1
      %p115 = scmp.eq.s32.totalorder %s14, 1
      %p116 = scmp.ne.s32.totalorder %s111, %s113
      %p117 = scmp.eq.s32.totalorder %s14, 0
      %p118 = por %p116, %p117
      %p119 = scmp.ne.s32.totalorder %s111, %s113
      %p120 = scmp.eq.s32.totalorder %s19, 1
      %p121 = por %p119, %p120
      %p122 = scmp.ne.s32.totalorder %s113, %s114
      %p123 = scmp.eq.s32.totalorder %s19, 0
      %p124 = por %p122, %p123
      %p125 = scmp.ne.s32.totalorder %s113, %s114
      %p126 = scmp.eq.s32.totalorder %s20, 1
      %p127 = por %p125, %p126
      %p129 = scmp.ne.s32.totalorder %s114, %s128
      %p130 = scmp.eq.s32.totalorder %s20, 0
      %p131 = por %p129, %p130
      %s132 = ssub.s32 %s14, %s21
      %p133 = scmp.eq.s32.totalorder %s132, 0
      %s135 = sadd.s32 %s134, 1
      %s136 = scalar_select %p133, %s134, %s135
      %p139 = pneg %p133
      %p140 = scmp.eq.s32.totalorder %s14, 1
      %p141 = por %p139, %p140
      %p142 = scmp.ne.s32.totalorder %s134, %s137
      %p143 = scmp.eq.s32.totalorder %s14, 0
      %p144 = por %p142, %p143
      %p145 = scmp.ne.s32.totalorder %s134, %s137
      %p146 = scmp.eq.s32.totalorder %s19, 1
      %p147 = por %p145, %p146
      %p148 = scmp.ne.s32.totalorder %s137, %s138
      %p149 = scmp.eq.s32.totalorder %s19, 0
      %p150 = por %p148, %p149
      %p151 = scmp.ne.s32.totalorder %s137, %s138
      %p152 = scmp.eq.s32.totalorder %s20, 1
      %p153 = por %p151, %p152
      %p155 = scmp.ne.s32.totalorder %s138, %s154
      %p156 = scmp.eq.s32.totalorder %s20, 0
      %p157 = por %p155, %p156
      %p158 = scmp.le.s32.totalorder 1, %s14
      %p159 = scmp.lt.s32.totalorder %s14, 3
      %p160 = pnand %p158, %p159
      %p161 = pneg %p160
      // Predicated region
      $region9: #{tpu_custom_call.1} parent=5 // pred_check
        _
      $region10: #{tpu_custom_call.1} parent=5 // pred_check_branch
        %163 = sbr.rel (%p160) target = $region12
      $region11: #{tpu_custom_call.1} parent=5 // pred_region
        %s164 = ssub.s32 %s14, 1
        // Predicated region
        $region13: #{tpu_custom_call.1} parent=11 // pred_check
          %p165 = pneg %p61
        $region14: #{tpu_custom_call.1} parent=11 // pred_check_branch
          %167 = sbr.rel (%p165) target = $region16
        $region15: #{tpu_custom_call.1} parent=11 // pred_region
          _
        $region16: #{tpu_custom_call.1} parent=11 // pred_fallthru
          _
        // Predicated region
        $region17: #{tpu_custom_call.1} parent=11 // pred_check
          %p168 = pneg %p82
        $region18: #{tpu_custom_call.1} parent=11 // pred_check_branch
          %170 = sbr.rel (%p168) target = $region20
        $region19: #{tpu_custom_call.1} parent=11 // pred_region
          _
        $region20: #{tpu_custom_call.1} parent=11 // pred_fallthru
          _
        // Predicated region
        $region21: #{tpu_custom_call.1} parent=11 // pred_check
          %p171 = pneg %p103
        $region22: #{tpu_custom_call.1} parent=11 // pred_check_branch
          %173 = sbr.rel (%p171) target = $region24
        $region23: #{tpu_custom_call.1} parent=11 // pred_region
          _
        $region24: #{tpu_custom_call.1} parent=11 // pred_fallthru
          _
        // Predicated region
        $region25: #{tpu_custom_call.1} parent=11 // pred_check
          %p174 = pneg %p124
        $region26: #{tpu_custom_call.1} parent=11 // pred_check_branch
          %176 = sbr.rel (%p174) target = $region28
        $region27: #{tpu_custom_call.1} parent=11 // pred_region
          _
        $region28: #{tpu_custom_call.1} parent=11 // pred_fallthru
          _
      $region12: #{tpu_custom_call.1} parent=5 // pred_fallthru
        _
      %p177 = scmp.lt.s32.totalorder %s14, 2
      // Predicated region
      $region29: #{tpu_custom_call.1} parent=5 // pred_check
        %p178 = pneg %p177
      $region30: #{tpu_custom_call.1} parent=5 // pred_check_branch
        %180 = sbr.rel (%p178) target = $region32
      $region31: #{tpu_custom_call.1} parent=5 // pred_region
        // Predicated region
        $region33: #{tpu_custom_call.1} parent=31 // pred_check
          %p181 = pneg %p34
        $region34: #{tpu_custom_call.1} parent=31 // pred_check_branch
          %183 = sbr.rel (%p181) target = $region36
        $region35: #{tpu_custom_call.1} parent=31 // pred_region
          %p184 = scmp.lt.s32.totalorder %s14, 1
          %s185 = scalar_select %p184, %s14, 1
          %s186 = smul.addr %s185, 8
          %s187 = scalar_lea.vmem %s0, %s186
        $region36: #{tpu_custom_call.1} parent=31 // pred_fallthru
          _
      $region32: #{tpu_custom_call.1} parent=5 // pred_fallthru
        _
      %p188 = scmp.le.s32.totalorder 1, %s14
      %p189 = scmp.lt.s32.totalorder %s14, 3
      %p190 = pnand %p188, %p189
      %p191 = pneg %p190
      // Predicated region
      $region37: #{tpu_custom_call.1} parent=5 // pred_check
        _
      $region38: #{tpu_custom_call.1} parent=5 // pred_check_branch
        %193 = sbr.rel (%p190) target = $region40
      $region39: #{tpu_custom_call.1} parent=5 // pred_region
        %s194 = ssub.s32 %s14, 1
        %p195 = scmp.lt.s32.totalorder %s19, 1
        %s196 = scalar_select %p195, %s19, 1
        %s197 = smul.addr %s196, 8
        %s198 = scalar_lea.vmem %s0, %s197
        %p199 = pneg %p40
        %p200 = pneg %p37
        %p201 = pneg %p61
        %p202 = pneg %p58
        %p203 = pneg %p82
        %p204 = pneg %p79
        %p205 = pneg %p103
        %p206 = pneg %p100
        %p207 = pneg %p124
        %p208 = pneg %p121
        %p209 = pneg %p150
        %p210 = pneg %p147
        %s211 = sand.u32 %s137, 1
        %s212 = scalar_lea.sflag [#allocation3], %s211
        %s213 = sand.u32 %s137, 1
        %s214 = smul.addr %s213, 8
        %s215 = scalar_lea.vmem [#allocation2], %s214
        %p216 = scmp.lt.s32.totalorder %s19, 1
        %s217 = scalar_select %p216, %s19, 1
        %s218 = smul.addr %s217, 8
        %s219 = scalar_lea.vmem %s0, %s218
        %v220 = vld [vmem:[%s219] sm:$0xff]
        %v221 = vld [vmem:[%s1] sm:$0xff]
        %v222 = vld [vmem:[%s1 + $0x8] sm:$0xff]
        %v223 = vld [vmem:[%s1 + $0x10] sm:$0xff]
        %v224 = vld [vmem:[%s1 + $0x18] sm:$0xff]
        %v225 = vld [vmem:[%s2] sm:$0x1]
        %v227 = vperm.slane %v225, 0
        %vm229 = vcmask 261120
        %v231 = vsel %vm229, %v220, 0
        %233 = vmatpush.msra.mxu0 0.0
        %234 = vmatpush.msra.mxu0 0.0
        %235 = vmatpush.msra.mxu0 0.0
        %236 = vmatpush.msra.mxu0 0.0
        %237 = vmatpush.msra.mxu0 0.0
        %238 = vmatpush.msra.mxu0 0.0
        %239 = vmatpush.msra.mxu0 0.0
        %240 = vmatpush.msra.mxu0 0.0
        %241 = vmatpush.msra.mxu0 0.0
        %242 = vmatpush.msra.mxu0 0.0
        %243 = vmatpush.msra.mxu0 0.0
        %244 = vmatpush.msra.mxu0 0.0
        %245 = vmatpush.msra.mxu0 %v224
        %246 = vmatpush.msra.mxu0 %v223
        %247 = vmatpush.msra.mxu0 %v222
        %248 = vmatpush.msra.mxu0 %v221
        %249 = vmatmul.f32.gmra.mxu0 %v231
        %v250 = vpop.f32.mrf.mxu0
        %v251 = vadd.f32 %v227, %v250
        %252 = vdwg.mxu0
        %v253 = vmax.f32 %v251, 0.0
        %v254 = vld [vmem:[%s3] sm:$0xff]
        %v255 = vld [vmem:[%s3 + $0x8] sm:$0xff]
        %v256 = vld [vmem:[%s4] sm:$0x1]
        %v258 = vperm.slane %v256, 0
        %vm260 = vcmask 130048
        %v262 = vsel %vm260, %v253, 0
        %264 = vmatpush.msra.mxu0 0.0
        %265 = vmatpush.msra.mxu0 0.0
        %266 = vmatpush.msra.mxu0 0.0
        %267 = vmatpush.msra.mxu0 0.0
        %268 = vmatpush.msra.mxu0 0.0
        %269 = vmatpush.msra.mxu0 0.0
        %270 = vmatpush.msra.mxu0 0.0
        %271 = vmatpush.msra.mxu0 0.0
        %272 = vmatpush.msra.mxu0 0.0
        %273 = vmatpush.msra.mxu0 0.0
        %274 = vmatpush.msra.mxu0 0.0
        %275 = vmatpush.msra.mxu0 0.0
        %276 = vmatpush.msra.mxu0 0.0
        %277 = vmatpush.msra.mxu0 0.0
        %278 = vmatpush.msra.mxu0 %v255
        %279 = vmatpush.msra.mxu0 %v254
        %280 = vmatmul.f32.gmra.mxu0 %v262
        %v281 = vpop.f32.mrf.mxu0
        %v282 = vadd.f32 %v258, %v281
        %283 = vdwg.mxu0
        %v284 = vmax.f32 %v282, 0.0
        %286 = vrot.lane.b32.xlu0 %v284, 32
        %v287 = vpop.permute.xlu0 %286
        %v289 = vsel %vm229, %v220, %v287
        %vm290 = vcmask 392192
        %291 = vst.msk [vmem:[%s215] sm:$0xff] %vm290, %v289
        %s292 = sand.u32 %s137, 1
        %s293 = scalar_lea.sflag [#allocation3], %s292
        %s294 = sand.u32 %s137, 1
        %s295 = smul.addr %s294, 8
        %s296 = scalar_lea.vmem [#allocation2], %s295
        // Predicated region
        $region41: #{tpu_custom_call.1} parent=39 // pred_check
          %p297 = pneg %p147
        $region42: #{tpu_custom_call.1} parent=39 // pred_check_branch
          %299 = sbr.rel (%p297) target = $region44
        $region43: #{tpu_custom_call.1} parent=39 // pred_region
          %301 = vsyncadd %s293, 0
          %s302 = smul.addr %s19, 8
          %s303 = scalar_lea.hbm %s5, %s302
          %s305 = sshll.u32 %s296, 4
          %s306 = int_to_ptr.vmem [resolvable:$true] %s305
          %s307 = sshll.u32 %s303, 4
          %s308 = int_to_ptr.hbm [resolvable:$true] %s307
          %310 = dma.vmem_to_hbm [thread:$0]  %s306, 128, %s308, %s293
        $region44: #{tpu_custom_call.1} parent=39 // pred_fallthru
          _
      $region40: #{tpu_custom_call.1} parent=5 // pred_fallthru
        _
      %p311 = scmp.le.s32.totalorder 2, %s14
      // Predicated region
      $region45: #{tpu_custom_call.1} parent=5 // pred_check
        %p312 = pneg %p311
      $region46: #{tpu_custom_call.1} parent=5 // pred_check_branch
        %314 = sbr.rel (%p312) target = $region48
      $region47: #{tpu_custom_call.1} parent=5 // pred_region
        %s315 = ssub.s32 %s14, 2
        // Predicated region
        $region49: #{tpu_custom_call.1} parent=47 // pred_check
          %p316 = pneg %p153
        $region50: #{tpu_custom_call.1} parent=47 // pred_check_branch
          %318 = sbr.rel (%p316) target = $region52
        $region51: #{tpu_custom_call.1} parent=47 // pred_region
          %s319 = sand.u32 %s138, 1
          %s320 = scalar_lea.sflag [#allocation3], %s319
          %s321 = sand.u32 %s138, 1
          %s322 = smul.addr %s321, 8
          %s323 = scalar_lea.vmem [#allocation2], %s322
          %325 = dma.done %s320, 128
        $region52: #{tpu_custom_call.1} parent=47 // pred_fallthru
          _
      $region48: #{tpu_custom_call.1} parent=5 // pred_fallthru
        _
    $region6: #{tpu_custom_call.1} parent=1 // loop_footer
      %s18 = sadd.s32 1, %s14
    $region7: #{tpu_custom_call.1} parent=1 // loop_footer_branch
      %13 = sbr.rel target = $region3
    $region8: #{tpu_custom_call.1} parent=1 // loop_exit
      _
    %326 = vsyncpa [#allocation3], 1
    %s327 = scalar_lea.sflag [#allocation3], 1
    %328 = vsyncpa %s327, 1

// kernel: tpu_custom_call.1
$region0: #{tpu_custom_call.1}
  #allocation0 [shape = 'u32[]', space=smem, size = 0x4, offset = 0x4, fixed_abs, tag = 'smem constant byte address 0x4 - core index']
  #allocation1 [shape = 'u32[72,128]{1,0:T(1,128)}', space=vmem, size = 0x9000, scoped, tag = 'internal scratch']
  %s0 = inlined_call_operand.vmem [shape: f32[16,32], index: 0, kind: input, shape index: {}]
  %s1 = inlined_call_operand.vmem [shape: f32[32,16], index: 1, kind: input, shape index: {}]
  %s2 = inlined_call_operand.vmem [shape: f32[1,16], index: 2, kind: input, shape index: {}]
  %s3 = inlined_call_operand.vmem [shape: f32[16,16], index: 3, kind: input, shape index: {}]
  %s4 = inlined_call_operand.vmem [shape: f32[1,16], index: 4, kind: input, shape index: {}]
  %s5 = inlined_call_operand.hbm [shape: f32[16,48], index: 5, kind: output, shape index: {}]
  %s6 = sld [smem:[#allocation0]]
  $region53: #{tpu_custom_call.1} parent=0
    _
  %s8 = ssub.s32 1, %s6
  %s9 = scalar_select 0, %s8, %s6
  $region1: #{tpu_custom_call.1} parent=0
    #allocation2 [shape = 'u8[8192]{0}', space=vmem, size = 0x2000, scoped, tag = 'output window, operand 0']
    #allocation3 [shape = 's32[2]{0}', space=sflag, size = 0x8, scoped, tag = 'scoped memory for tpu_custom_call.1']
    %10 = vsyncpa [#allocation3], 0
    %s11 = scalar_lea.sflag [#allocation3], 1
    %12 = vsyncpa %s11, 0
    loop: start=0, step=1, limit=4
    $region2: #{tpu_custom_call.1} parent=1 // loop_pre_header
      _
    $region3: #{tpu_custom_call.1} parent=1 // loop_header
      %s14 = sphi 0, %s18
      %p15 = scmp.ge.s32.totalorder %s14, 4
      %s24 = sphi 0, %s26
      %s27 = sphi 0, %s24
      %s28 = sphi 0, %s27
      %s44 = sphi 0, %s28
      %s48 = sphi 0, %s48
      %s50 = sphi 0, %s48
      %s51 = sphi 0, %s50
      %s65 = sphi 0, %s51
      %s69 = sphi 0, %s69
      %s71 = sphi 0, %s69
      %s72 = sphi 0, %s71
      %s86 = sphi 0, %s72
      %s90 = sphi 0, %s90
      %s92 = sphi 0, %s90
      %s93 = sphi 0, %s92
      %s107 = sphi 0, %s93
      %s111 = sphi 0, %s111
      %s113 = sphi 0, %s111
      %s114 = sphi 0, %s113
      %s128 = sphi 0, %s114
      %s134 = sphi 0, %s136
      %s137 = sphi 0, %s134
      %s138 = sphi 0, %s137
      %s154 = sphi 0, %s138
    $region4: #{tpu_custom_call.1} parent=1 // loop_header_branch
      %17 = sbr.rel (%p15) target = $region8
    $region5: #{tpu_custom_call.1} parent=1 // loop_body
      %s19 = ssub.s32 %s14, 1
      %s20 = ssub.s32 %s14, 2
      %s21 = sadd.s32 %s14, 1
      %s22 = ssub.s32 %s14, %s21
      %p23 = scmp.eq.s32.totalorder %s22, 0
      %s25 = sadd.s32 %s24, 1
      %s26 = scalar_select %p23, %s24, %s25
      %p29 = pneg %p23
      %p30 = scmp.eq.s32.totalorder %s14, 1
      %p31 = por %p29, %p30
      %p32 = scmp.ne.s32.totalorder %s24, %s27
      %p33 = scmp.eq.s32.totalorder %s14, 0
      %p34 = por %p32, %p33
      %p35 = scmp.ne.s32.totalorder %s24, %s27
      %p36 = scmp.eq.s32.totalorder %s19, 1
      %p37 = por %p35, %p36
      %p38 = scmp.ne.s32.totalorder %s27, %s28
      %p39 = scmp.eq.s32.totalorder %s19, 0
      %p40 = por %p38, %p39
      %p41 = scmp.ne.s32.totalorder %s27, %s28
      %p42 = scmp.eq.s32.totalorder %s20, 1
      %p43 = por %p41, %p42
      %p45 = scmp.ne.s32.totalorder %s28, %s44
      %p46 = scmp.eq.s32.totalorder %s20, 0
      %p47 = por %p45, %p46
      %s49 = sadd.s32 %s48, 1
      %p52 = scmp.eq.s32.totalorder %s14, 1
      %p53 = scmp.ne.s32.totalorder %s48, %s50
      %p54 = scmp.eq.s32.totalorder %s14, 0
      %p55 = por %p53, %p54
      %p56 = scmp.ne.s32.totalorder %s48, %s50
      %p57 = scmp.eq.s32.totalorder %s19, 1
      %p58 = por %p56, %p57
      %p59 = scmp.ne.s32.totalorder %s50, %s51
      %p60 = scmp.eq.s32.totalorder %s19, 0
      %p61 = por %p59, %p60
      %p62 = scmp.ne.s32.totalorder %s50, %s51
      %p63 = scmp.eq.s32.totalorder %s20, 1
      %p64 = por %p62, %p63
      %p66 = scmp.ne.s32.totalorder %s51, %s65
      %p67 = scmp.eq.s32.totalorder %s20, 0
      %p68 = por %p66, %p67
      %s70 = sadd.s32 %s69, 1
      %p73 = scmp.eq.s32.totalorder %s14, 1
      %p74 = scmp.ne.s32.totalorder %s69, %s71
      %p75 = scmp.eq.s32.totalorder %s14, 0
      %p76 = por %p74, %p75
      %p77 = scmp.ne.s32.totalorder %s69, %s71
      %p78 = scmp.eq.s32.totalorder %s19, 1
      %p79 = por %p77, %p78
      %p80 = scmp.ne.s32.totalorder %s71, %s72
      %p81 = scmp.eq.s32.totalorder %s19, 0
      %p82 = por %p80, %p81
      %p83 = scmp.ne.s32.totalorder %s71, %s72
      %p84 = scmp.eq.s32.totalorder %s20, 1
      %p85 = por %p83, %p84
      %p87 = scmp.ne.s32.totalorder %s72, %s86
      %p88 = scmp.eq.s32.totalorder %s20, 0
      %p89 = por %p87, %p88
      %s91 = sadd.s32 %s90, 1
      %p94 = scmp.eq.s32.totalorder %s14, 1
      %p95 = scmp.ne.s32.totalorder %s90, %s92
      %p96 = scmp.eq.s32.totalorder %s14, 0
      %p97 = por %p95, %p96
      %p98 = scmp.ne.s32.totalorder %s90, %s92
      %p99 = scmp.eq.s32.totalorder %s19, 1
      %p100 = por %p98, %p99
      %p101 = scmp.ne.s32.totalorder %s92, %s93
      %p102 = scmp.eq.s32.totalorder %s19, 0
      %p103 = por %p101, %p102
      %p104 = scmp.ne.s32.totalorder %s92, %s93
      %p105 = scmp.eq.s32.totalorder %s20, 1
      %p106 = por %p104, %p105
      %p108 = scmp.ne.s32.totalorder %s93, %s107
      %p109 = scmp.eq.s32.totalorder %s20, 0
      %p110 = por %p108, %p109
      %s112 = sadd.s32 %s111, 1
      %p115 = scmp.eq.s32.totalorder %s14, 1
      %p116 = scmp.ne.s32.totalorder %s111, %s113
      %p117 = scmp.eq.s32.totalorder %s14, 0
      %p118 = por %p116, %p117
      %p119 = scmp.ne.s32.totalorder %s111, %s113
      %p120 = scmp.eq.s32.totalorder %s19, 1
      %p121 = por %p119, %p120
      %p122 = scmp.ne.s32.totalorder %s113, %s114
      %p123 = scmp.eq.s32.totalorder %s19, 0
      %p124 = por %p122, %p123
      %p125 = scmp.ne.s32.totalorder %s113, %s114
      %p126 = scmp.eq.s32.totalorder %s20, 1
      %p127 = por %p125, %p126
      %p129 = scmp.ne.s32.totalorder %s114, %s128
      %p130 = scmp.eq.s32.totalorder %s20, 0
      %p131 = por %p129, %p130
      %s132 = ssub.s32 %s14, %s21
      %p133 = scmp.eq.s32.totalorder %s132, 0
      %s135 = sadd.s32 %s134, 1
      %s136 = scalar_select %p133, %s134, %s135
      %p139 = pneg %p133
      %p140 = scmp.eq.s32.totalorder %s14, 1
      %p141 = por %p139, %p140
      %p142 = scmp.ne.s32.totalorder %s134, %s137
      %p143 = scmp.eq.s32.totalorder %s14, 0
      %p144 = por %p142, %p143
      %p145 = scmp.ne.s32.totalorder %s134, %s137
      %p146 = scmp.eq.s32.totalorder %s19, 1
      %p147 = por %p145, %p146
      %p148 = scmp.ne.s32.totalorder %s137, %s138
      %p149 = scmp.eq.s32.totalorder %s19, 0
      %p150 = por %p148, %p149
      %p151 = scmp.ne.s32.totalorder %s137, %s138
      %p152 = scmp.eq.s32.totalorder %s20, 1
      %p153 = por %p151, %p152
      %p155 = scmp.ne.s32.totalorder %s138, %s154
      %p156 = scmp.eq.s32.totalorder %s20, 0
      %p157 = por %p155, %p156
      %p158 = scmp.le.s32.totalorder 1, %s14
      %p159 = scmp.lt.s32.totalorder %s14, 3
      %p160 = pnand %p158, %p159
      %p161 = pneg %p160
      // Predicated region
      $region9: #{tpu_custom_call.1} parent=5 // pred_check
        _
      $region10: #{tpu_custom_call.1} parent=5 // pred_check_branch
        %163 = sbr.rel (%p160) target = $region12
      $region11: #{tpu_custom_call.1} parent=5 // pred_region
        %s164 = ssub.s32 %s14, 1
        // Predicated region
        $region13: #{tpu_custom_call.1} parent=11 // pred_check
          %p165 = pneg %p61
        $region14: #{tpu_custom_call.1} parent=11 // pred_check_branch
          %167 = sbr.rel (%p165) target = $region16
        $region15: #{tpu_custom_call.1} parent=11 // pred_region
          _
        $region16: #{tpu_custom_call.1} parent=11 // pred_fallthru
          _
        // Predicated region
        $region17: #{tpu_custom_call.1} parent=11 // pred_check
          %p168 = pneg %p82
        $region18: #{tpu_custom_call.1} parent=11 // pred_check_branch
          %170 = sbr.rel (%p168) target = $region20
        $region19: #{tpu_custom_call.1} parent=11 // pred_region
          _
        $region20: #{tpu_custom_call.1} parent=11 // pred_fallthru
          _
        // Predicated region
        $region21: #{tpu_custom_call.1} parent=11 // pred_check
          %p171 = pneg %p103
        $region22: #{tpu_custom_call.1} parent=11 // pred_check_branch
          %173 = sbr.rel (%p171) target = $region24
        $region23: #{tpu_custom_call.1} parent=11 // pred_region
          _
        $region24: #{tpu_custom_call.1} parent=11 // pred_fallthru
          _
        // Predicated region
        $region25: #{tpu_custom_call.1} parent=11 // pred_check
          %p174 = pneg %p124
        $region26: #{tpu_custom_call.1} parent=11 // pred_check_branch
          %176 = sbr.rel (%p174) target = $region28
        $region27: #{tpu_custom_call.1} parent=11 // pred_region
          _
        $region28: #{tpu_custom_call.1} parent=11 // pred_fallthru
          _
      $region12: #{tpu_custom_call.1} parent=5 // pred_fallthru
        _
      %p177 = scmp.lt.s32.totalorder %s14, 2
      // Predicated region
      $region29: #{tpu_custom_call.1} parent=5 // pred_check
        %p178 = pneg %p177
      $region30: #{tpu_custom_call.1} parent=5 // pred_check_branch
        %180 = sbr.rel (%p178) target = $region32
      $region31: #{tpu_custom_call.1} parent=5 // pred_region
        // Predicated region
        $region33: #{tpu_custom_call.1} parent=31 // pred_check
          %p181 = pneg %p34
        $region34: #{tpu_custom_call.1} parent=31 // pred_check_branch
          %183 = sbr.rel (%p181) target = $region36
        $region35: #{tpu_custom_call.1} parent=31 // pred_region
          %p184 = scmp.lt.s32.totalorder %s14, 1
          %s185 = scalar_select %p184, %s14, 1
          %s186 = smul.addr %s185, 8
          %s187 = scalar_lea.vmem %s0, %s186
        $region36: #{tpu_custom_call.1} parent=31 // pred_fallthru
          _
      $region32: #{tpu_custom_call.1} parent=5 // pred_fallthru
        _
      %p188 = scmp.le.s32.totalorder 1, %s14
      %p189 = scmp.lt.s32.totalorder %s14, 3
      %p190 = pnand %p188, %p189
      %p191 = pneg %p190
      // Predicated region
      $region37: #{tpu_custom_call.1} parent=5 // pred_check
        _
      $region38: #{tpu_custom_call.1} parent=5 // pred_check_branch
        %193 = sbr.rel (%p190) target = $region40
      $region39: #{tpu_custom_call.1} parent=5 // pred_region
        %s194 = ssub.s32 %s14, 1
        %p195 = scmp.lt.s32.totalorder %s19, 1
        %s196 = scalar_select %p195, %s19, 1
        %s197 = smul.addr %s196, 8
        %s198 = scalar_lea.vmem %s0, %s197
        %p199 = pneg %p40
        %p200 = pneg %p37
        %p201 = pneg %p61
        %p202 = pneg %p58
        %p203 = pneg %p82
        %p204 = pneg %p79
        %p205 = pneg %p103
        %p206 = pneg %p100
        %p207 = pneg %p124
        %p208 = pneg %p121
        %p209 = pneg %p150
        %p210 = pneg %p147
        %s211 = sand.u32 %s137, 1
        %s212 = scalar_lea.sflag [#allocation3], %s211
        %s213 = sand.u32 %s137, 1
        %s214 = smul.addr %s213, 8
        %s215 = scalar_lea.vmem [#allocation2], %s214
        %p216 = scmp.lt.s32.totalorder %s19, 1
        %s217 = scalar_select %p216, %s19, 1
        %s218 = smul.addr %s217, 8
        %s219 = scalar_lea.vmem %s0, %s218
        %v220 = vld [vmem:[%s219] sm:$0xff]
        %v221 = vld [vmem:[%s1] sm:$0xff]
        %v222 = vld [vmem:[%s1 + $0x8] sm:$0xff]
        %v223 = vld [vmem:[%s1 + $0x10] sm:$0xff]
        %v224 = vld [vmem:[%s1 + $0x18] sm:$0xff]
        %v225 = vld [vmem:[%s2] sm:$0x1]
        %v227 = vperm.slane %v225, 0
        %vm229 = vcmask 261120
        %v231 = vsel %vm229, %v220, 0
        %233 = vmatpush.msra.mxu0 0.0
        %234 = vmatpush.msra.mxu0 0.0
        %235 = vmatpush.msra.mxu0 0.0
        %236 = vmatpush.msra.mxu0 0.0
        %237 = vmatpush.msra.mxu0 0.0
        %238 = vmatpush.msra.mxu0 0.0
        %239 = vmatpush.msra.mxu0 0.0
        %240 = vmatpush.msra.mxu0 0.0
        %241 = vmatpush.msra.mxu0 0.0
        %242 = vmatpush.msra.mxu0 0.0
        %243 = vmatpush.msra.mxu0 0.0
        %244 = vmatpush.msra.mxu0 0.0
        %245 = vmatpush.msra.mxu0 %v224
        %246 = vmatpush.msra.mxu0 %v223
        %247 = vmatpush.msra.mxu0 %v222
        %248 = vmatpush.msra.mxu0 %v221
        %249 = vmatmul.f32.gmra.mxu0 %v231
        %v250 = vpop.f32.mrf.mxu0
        %v251 = vadd.f32 %v227, %v250
        %252 = vdwg.mxu0
        %v253 = vmax.f32 %v251, 0.0
        %v254 = vld [vmem:[%s3] sm:$0xff]
        %v255 = vld [vmem:[%s3 + $0x8] sm:$0xff]
        %v256 = vld [vmem:[%s4] sm:$0x1]
        %v258 = vperm.slane %v256, 0
        %vm260 = vcmask 130048
        %v262 = vsel %vm260, %v253, 0
        %264 = vmatpush.msra.mxu0 0.0
        %265 = vmatpush.msra.mxu0 0.0
        %266 = vmatpush.msra.mxu0 0.0
        %267 = vmatpush.msra.mxu0 0.0
        %268 = vmatpush.msra.mxu0 0.0
        %269 = vmatpush.msra.mxu0 0.0
        %270 = vmatpush.msra.mxu0 0.0
        %271 = vmatpush.msra.mxu0 0.0
        %272 = vmatpush.msra.mxu0 0.0
        %273 = vmatpush.msra.mxu0 0.0
        %274 = vmatpush.msra.mxu0 0.0
        %275 = vmatpush.msra.mxu0 0.0
        %276 = vmatpush.msra.mxu0 0.0
        %277 = vmatpush.msra.mxu0 0.0
        %278 = vmatpush.msra.mxu0 %v255
        %279 = vmatpush.msra.mxu0 %v254
        %280 = vmatmul.f32.gmra.mxu0 %v262
        %v281 = vpop.f32.mrf.mxu0
        %v282 = vadd.f32 %v258, %v281
        %283 = vdwg.mxu0
        %v284 = vmax.f32 %v282, 0.0
        %286 = vrot.lane.b32.xlu0 %v284, 32
        %v287 = vpop.permute.xlu0 %286
        %v289 = vsel %vm229, %v220, %v287
        %vm290 = vcmask 392192
        %291 = vst.msk [vmem:[%s215] sm:$0xff] %vm290, %v289
        %s292 = sand.u32 %s137, 1
        %s293 = scalar_lea.sflag [#allocation3], %s292
        %s294 = sand.u32 %s137, 1
        %s295 = smul.addr %s294, 8
        %s296 = scalar_lea.vmem [#allocation2], %s295
        // Predicated region
        $region41: #{tpu_custom_call.1} parent=39 // pred_check
          %p297 = pneg %p147
        $region42: #{tpu_custom_call.1} parent=39 // pred_check_branch
          %299 = sbr.rel (%p297) target = $region44
        $region43: #{tpu_custom_call.1} parent=39 // pred_region
          %301 = vsyncadd %s293, 0
          %s302 = smul.addr %s19, 8
          %s303 = scalar_lea.hbm %s5, %s302
          %s305 = sshll.u32 %s296, 4
          %s306 = int_to_ptr.vmem [resolvable:$true] %s305
          %s307 = sshll.u32 %s303, 4
          %s308 = int_to_ptr.hbm [resolvable:$true] %s307
          %310 = dma.vmem_to_hbm [thread:$0]  %s306, 128, %s308, %s293
        $region44: #{tpu_custom_call.1} parent=39 // pred_fallthru
          _
      $region40: #{tpu_custom_call.1} parent=5 // pred_fallthru
        _
      %p311 = scmp.le.s32.totalorder 2, %s14
      // Predicated region
      $region45: #{tpu_custom_call.1} parent=5 // pred_check
        %p312 = pneg %p311
      $region46: #{tpu_custom_call.1} parent=5 // pred_check_branch
        %314 = sbr.rel (%p312) target = $region48
      $region47: #{tpu_custom_call.1} parent=5 // pred_region
        %s315 = ssub.s32 %s14, 2
        // Predicated region
        $region49: #{tpu_custom_call.1} parent=47 // pred_check
          %p316 = pneg %p153
        $region50: #{tpu_custom_call.1} parent=47 // pred_check_branch
          %318 = sbr.rel (%p316) target = $region52
        $region51: #{tpu_custom_call.1} parent=47 // pred_region
          %s319 = sand.u32 %s138, 1
          %s320 = scalar_lea.sflag [#allocation3], %s319
          %s321 = sand.u32 %s138, 1
          %s322 = smul.addr %s321, 8
          %s323 = scalar_lea.vmem [#allocation2], %s322
          %325 = dma.done %s320, 128
        $region52: #{tpu_custom_call.1} parent=47 // pred_fallthru
          _
      $region48: #{tpu_custom_call.1} parent=5 // pred_fallthru
        _
    $region6: #{tpu_custom_call.1} parent=1 // loop_footer
      %s18 = sadd.s32 1, %s14
    $region7: #{tpu_custom_call.1} parent=1 // loop_footer_branch
      %13 = sbr.rel target = $region3
    $region8: #{tpu_custom_call.1} parent=1 // loop_exit
      _
    %326 = vsyncpa [#allocation3], 1
    %s327 = scalar_lea.sflag [#allocation3], 1
    %328 = vsyncpa %s327, 1

</llo_original>
